<compile_context>
chip_gen: v7x
topology: tpu7x:2x2x1
jax: 0.10.0
libtpu: 0.0.40
codegen_flags: <defaults>
</compile_context>

<pallas_src>
import functools
import math

import jax
import jax.numpy as jnp
from jax import lax
from jax.experimental import pallas as pl
from jax.experimental.pallas import tpu as pltpu

LANES = 128
SUBLANES = 8
_EPS = 1e-6


def _dice_kernel(fix_ref, reg_ref, num_ref, den_ref, acc_fr, acc_sum, *,
                 m, chunk, chunks_per_split, needs_mask):
    """One (batch b, split s, chunk c) grid step.

    fix_ref/reg_ref: (1, chunk, 128) VMEM tiles of the flattened volume.
    num_ref/den_ref: (1, 1, 8, 128) VMEM output tiles of per-(b, s) partial
                     sums (numerator = sum(f*r), denominator = sum(f+r)).
    acc_*:           (8, 128) f32 VMEM accumulators.
    """
    s = pl.program_id(1)
    c = pl.program_id(2)

    @pl.when(c == 0)
    def _init():
        acc_fr[...] = jnp.zeros_like(acc_fr)
        acc_sum[...] = jnp.zeros_like(acc_sum)

    f = fix_ref[0].astype(jnp.float32)   # (chunk, 128)
    r = reg_ref[0].astype(jnp.float32)

    if needs_mask:
        # This split/chunk geometry overruns the m valid sublane rows; zero
        # the invalid rows (covers both the ragged last chunk and chunks that
        # belong entirely to the split-padding region).
        global_c = s * chunks_per_split + c
        rows = lax.broadcasted_iota(jnp.int32, (chunk, LANES), 0) + global_c * chunk
        valid = rows < m
        f = jnp.where(valid, f, 0.0)
        r = jnp.where(valid, r, 0.0)

    # Pure-VALU partial reduction: fold groups of 8 sublane rows (one vreg
    # each) into the (8, 128) accumulators; no cross-lane (XLU) work in the
    # steady-state loop.
    def _partial(x):
        return x.reshape(chunk // SUBLANES, SUBLANES, LANES).sum(axis=0)

    acc_fr[...] += _partial(f * r)
    acc_sum[...] += _partial(f + r)

    @pl.when(c == pl.num_programs(2) - 1)
    def _finalize():
        num_ref[...] = acc_fr[...].reshape(num_ref.shape)
        den_ref[...] = acc_sum[...].reshape(den_ref.shape)


def _dice_partial_sums(fix_img, reg_img, *, target_chunk=4096, num_splits=None):
    """Per-(batch, split) partial sums of fix*reg and fix+reg as (8,128) tiles."""
    assert fix_img.shape == reg_img.shape
    b = fix_img.shape[0]
    n = math.prod(fix_img.shape[1:])

    fix_flat = fix_img.reshape(b, n)          # metadata-only reshape
    reg_flat = reg_img.reshape(b, n)

    row = SUBLANES * LANES                    # 1024
    pad = (-n) % row
    if pad:
        # TODO(synk): mask the ragged tail in-kernel instead of zero-padding
        # (jnp.pad materializes an HBM copy); real volumes are normally
        # 1024-divisible so this path is rare.  Zero padding is exact for
        # these sums.
        fix_flat = jnp.pad(fix_flat, ((0, 0), (0, pad)))
        reg_flat = jnp.pad(reg_flat, ((0, 0), (0, pad)))
    m = (n + pad) // LANES                    # sublane rows, multiple of 8

    fix3 = fix_flat.reshape(b, m, LANES)
    reg3 = reg_flat.reshape(b, m, LANES)

    target_chunk = max(SUBLANES, (target_chunk // SUBLANES) * SUBLANES)
    chunk = m if m <= target_chunk else target_chunk
    num_chunks = pl.cdiv(m, chunk)

    if num_splits is None:
        # With B >= 2 the batch axis already feeds both v7x TensorCores; for a
        # single volume, split the chunk stream across two parallel slots.
        num_splits = 2 if (b == 1 and num_chunks >= 2) else 1
    num_splits = max(1, min(num_splits, num_chunks))
    cps = pl.cdiv(num_chunks, num_splits)     # chunks per split
    total_chunks = num_splits * cps
    needs_mask = (total_chunks * chunk) != m

    if total_chunks == num_chunks:
        in_idx = lambda i, s, c: (i, s * cps + c, 0)
    else:
        # Split geometry overruns the real chunk count: clamp the DMA to a
        # valid block; the kernel row-mask zeroes its contribution.
        last = num_chunks - 1
        in_idx = lambda i, s, c: (i, jnp.minimum(s * cps + c, last), 0)

    kernel = functools.partial(
        _dice_kernel, m=m, chunk=chunk, chunks_per_split=cps,
        needs_mask=needs_mask)

    itemsize = jnp.dtype(fix_img.dtype).itemsize
    cost = pl.CostEstimate(
        flops=3 * b * n,
        transcendentals=0,
        bytes_accessed=2 * b * n * itemsize
                       + 2 * b * num_splits * SUBLANES * LANES * 4,
    )

    out_shape_one = jax.ShapeDtypeStruct((b, num_splits, SUBLANES, LANES),
                                         jnp.float32)
    out_block = pl.BlockSpec((1, 1, SUBLANES, LANES),
                             lambda i, s, c: (i, s, 0, 0))

    num_part, den_part = pl.pallas_call(
        kernel,
        out_shape=(out_shape_one, out_shape_one),
        grid=(b, num_splits, cps),
        in_specs=[
            pl.BlockSpec((1, chunk, LANES), in_idx),
            pl.BlockSpec((1, chunk, LANES), in_idx),
        ],
        out_specs=(out_block, out_block),
        scratch_shapes=[
            pltpu.VMEM((SUBLANES, LANES), jnp.float32),
            pltpu.VMEM((SUBLANES, LANES), jnp.float32),
        ],
        compiler_params=pltpu.CompilerParams(
            dimension_semantics=("parallel", "parallel", "arbitrary")),
        cost_estimate=cost,
    )(fix3, reg3)
    return num_part, den_part


def dice_loss(fix: dict, mov: dict, reg: dict, deform_space, *,
              target_chunk=4096, num_splits=None):
    """Mirrors DiceLoss.forward(fix, mov, reg, deform_space)."""
    del mov, deform_space  # unused by the PyTorch module's forward
    b = fix["img"].shape[0]
    num_part, den_part = _dice_partial_sums(
        fix["img"], reg["img"], target_chunk=target_chunk,
        num_splits=num_splits)
    # Tiny epilogue: (b, num_splits, 8, 128) partials -> per-batch dice terms.
    numerator = 2.0 * jnp.sum(num_part, axis=(1, 2, 3))
    denominator = jnp.sum(den_part, axis=(1, 2, 3)) + _EPS
    return jnp.sum(1.0 - numerator / denominator) / b


def _reference(fix_img, reg_img):
    b = fix_img.shape[0]
    f = fix_img.astype(jnp.float32)
    r = reg_img.astype(jnp.float32)
    axes = tuple(range(1, f.ndim))
    num = 2.0 * jnp.sum(f * r, axis=axes)
    den = jnp.sum(f, axis=axes) + jnp.sum(r, axis=axes) + _EPS
    return jnp.sum(1.0 - num / den) / b


def _check(name, fix_img, reg_img, **kwargs):
    fix = {"img": fix_img}
    mov = {"img": fix_img}                                    # unused by forward
    reg = {"img": reg_img}
    deform_space = jnp.zeros((fix_img.shape[0], 3) + fix_img.shape[2:],
                             jnp.float32)                     # unused by forward
    got = jax.block_until_ready(dice_loss(fix, mov, reg, deform_space, **kwargs))
    want = _reference(fix_img, reg_img)
    assert jnp.allclose(got, want, rtol=2e-5, atol=1e-5), (name, got, want)


if __name__ == "__main__":
    key = jax.random.PRNGKey(0)
    ks = jax.random.split(key, 8)

    # Case 1: small volume, single chunk per batch element, no masking.
    shape1 = (2, 1, 8, 16, 16)
    _check("single_chunk",
           jax.random.uniform(ks[0], shape1, dtype=jnp.float32),
           jax.random.uniform(ks[1], shape1, dtype=jnp.float32))

    # Case 2: multi-chunk sequential streaming + ragged last chunk (mask) and
    # the 1024-pad path (n = 2560 -> padded to 3072, m = 24, chunk = 16).
    shape2 = (2, 1, 8, 16, 20)
    _check("masked_multichunk",
           jax.random.uniform(ks[2], shape2, dtype=jnp.float32),
           jax.random.uniform(ks[3], shape2, dtype=jnp.float32),
           target_chunk=16)

    # Case 3: B == 1 -> chunk-axis split across two parallel slots with a
    # non-divisible chunk count (m = 40, chunk = 8, 5 chunks over 2 splits:
    # clamped index_map + fully masked overrun chunk).
    shape3 = (1, 1, 8, 16, 40)
    _check("split_clamped",
           jax.random.uniform(ks[4], shape3, dtype=jnp.float32),
           jax.random.uniform(ks[5], shape3, dtype=jnp.float32),
           target_chunk=8)

    # Case 4: default chunking (chunk = 4096 sublane rows) with B == 1 split
    # and a ragged last chunk (m = 6144) -- compiles the steady-state path.
    shape4 = (1, 1, 64, 96, 128)
    _check("default_chunk_split",
           jax.random.uniform(ks[6], shape4, dtype=jnp.float32),
           jax.random.uniform(ks[7], shape4, dtype=jnp.float32))

    print("KERNEL_OK")
</pallas_src>

<mosaic_0001>
module attributes {stable_mosaic.version = 11 : i64} {
  func.func @_dice_kernel(%arg0: i32, %arg1: i32, %arg2: i32, %arg3: memref<1x16x128xf32, #tpu.memory_space<vmem>>, %arg4: memref<1x16x128xf32, #tpu.memory_space<vmem>>, %arg5: memref<1x1x8x128xf32, #tpu.memory_space<vmem>>, %arg6: memref<1x1x8x128xf32, #tpu.memory_space<vmem>>, %arg7: memref<8x128xf32, #tpu.memory_space<vmem>>, %arg8: memref<8x128xf32, #tpu.memory_space<vmem>>) attributes {dimension_semantics = [#tpu.dimension_semantics<parallel>, #tpu.dimension_semantics<parallel>, #tpu.dimension_semantics<arbitrary>], iteration_bounds = array<i64: 2, 1, 1>, scalar_prefetch = 0 : i64, scratch_operands = 2 : i64, tpu.core_type = #tpu.core_type<tc>, window_params = [{transform_indices = @transform_0, window_bounds = array<i64: 1, 16, 128>}, {transform_indices = @transform_1, window_bounds = array<i64: 1, 16, 128>}, {transform_indices = @transform_2, window_bounds = array<i64: 1, 1, 8, 128>}, {transform_indices = @transform_3, window_bounds = array<i64: 1, 1, 8, 128>}]} {
    %c0_i32 = arith.constant 0 : i32
    %0 = arith.cmpi eq, %arg2, %c0_i32 : i32
    %1 = arith.extui %0 : i1 to i32
    %c0_i32_0 = arith.constant 0 : i32
    %2 = arith.cmpi ne, %1, %c0_i32_0 : i32
    scf.if %2 {
      %cst_17 = arith.constant 0.000000e+00 : f32
      %22 = vector.broadcast %cst_17 : f32 to vector<8x128xf32>
      %c0_18 = arith.constant 0 : index
      %c0_19 = arith.constant 0 : index
      %23 = vector.load %arg7[%c0_18, %c0_19] : memref<8x128xf32, #tpu.memory_space<vmem>>, vector<8x128xf32>
      tpu.vector_store %arg7[%c0_18, %c0_19], %22 {strides = array<i32>} : memref<8x128xf32, #tpu.memory_space<vmem>>, vector<8x128xf32>,
      %cst_20 = arith.constant 0.000000e+00 : f32
      %24 = vector.broadcast %cst_20 : f32 to vector<8x128xf32>
      %c0_21 = arith.constant 0 : index
      %c0_22 = arith.constant 0 : index
      %25 = vector.load %arg8[%c0_21, %c0_22] : memref<8x128xf32, #tpu.memory_space<vmem>>, vector<8x128xf32>
      tpu.vector_store %arg8[%c0_21, %c0_22], %24 {strides = array<i32>} : memref<8x128xf32, #tpu.memory_space<vmem>>, vector<8x128xf32>,
    } else {
    }
    %c0 = arith.constant 0 : index
    %c0_1 = arith.constant 0 : index
    %c0_2 = arith.constant 0 : index
    %3 = vector.load %arg3[%c0, %c0_1, %c0_2] : memref<1x16x128xf32, #tpu.memory_space<vmem>>, vector<1x16x128xf32>
    %4 = vector.shape_cast %3 : vector<1x16x128xf32> to vector<16x128xf32>
    %c0_3 = arith.constant 0 : index
    %c0_4 = arith.constant 0 : index
    %c0_5 = arith.constant 0 : index
    %5 = vector.load %arg4[%c0_3, %c0_4, %c0_5] : memref<1x16x128xf32, #tpu.memory_space<vmem>>, vector<1x16x128xf32>
    %6 = vector.shape_cast %5 : vector<1x16x128xf32> to vector<16x128xf32>
    %c0_6 = arith.constant 0 : index
    %c0_7 = arith.constant 0 : index
    %7 = vector.load %arg7[%c0_6, %c0_7] : memref<8x128xf32, #tpu.memory_space<vmem>>, vector<8x128xf32>
    %8 = arith.mulf %4, %6 : vector<16x128xf32>
    %9 = vector.shape_cast %8 : vector<16x128xf32> to vector<2x8x128xf32>
    %cst = arith.constant dense<0.000000e+00> : vector<8x128xf32>
    %10 = vector.multi_reduction <add>, %9, %cst [0] : vector<2x8x128xf32> to vector<8x128xf32>
    %11 = arith.addf %7, %10 : vector<8x128xf32>
    %c0_8 = arith.constant 0 : index
    %c0_9 = arith.constant 0 : index
    %12 = vector.load %arg7[%c0_8, %c0_9] : memref<8x128xf32, #tpu.memory_space<vmem>>, vector<8x128xf32>
    tpu.vector_store %arg7[%c0_8, %c0_9], %11 {strides = array<i32>} : memref<8x128xf32, #tpu.memory_space<vmem>>, vector<8x128xf32>,
    %c0_10 = arith.constant 0 : index
    %c0_11 = arith.constant 0 : index
    %13 = vector.load %arg8[%c0_10, %c0_11] : memref<8x128xf32, #tpu.memory_space<vmem>>, vector<8x128xf32>
    %14 = arith.addf %4, %6 : vector<16x128xf32>
    %15 = vector.shape_cast %14 : vector<16x128xf32> to vector<2x8x128xf32>
    %cst_12 = arith.constant dense<0.000000e+00> : vector<8x128xf32>
    %16 = vector.multi_reduction <add>, %15, %cst_12 [0] : vector<2x8x128xf32> to vector<8x128xf32>
    %17 = arith.addf %13, %16 : vector<8x128xf32>
    %c0_13 = arith.constant 0 : index
    %c0_14 = arith.constant 0 : index
    %18 = vector.load %arg8[%c0_13, %c0_14] : memref<8x128xf32, #tpu.memory_space<vmem>>, vector<8x128xf32>
    tpu.vector_store %arg8[%c0_13, %c0_14], %17 {strides = array<i32>} : memref<8x128xf32, #tpu.memory_space<vmem>>, vector<8x128xf32>,
    %c0_i32_15 = arith.constant 0 : i32
    %19 = arith.cmpi eq, %arg2, %c0_i32_15 : i32
    %20 = arith.extui %19 : i1 to i32
    %c0_i32_16 = arith.constant 0 : i32
    %21 = arith.cmpi ne, %20, %c0_i32_16 : i32
    scf.if %21 {
      %c0_17 = arith.constant 0 : index
      %c0_18 = arith.constant 0 : index
      %22 = vector.load %arg7[%c0_17, %c0_18] : memref<8x128xf32, #tpu.memory_space<vmem>>, vector<8x128xf32>
      %23 = vector.shape_cast %22 : vector<8x128xf32> to vector<1x1x8x128xf32>
      %c0_19 = arith.constant 0 : index
      %c0_20 = arith.constant 0 : index
      %c0_21 = arith.constant 0 : index
      %c0_22 = arith.constant 0 : index
      %24 = vector.load %arg5[%c0_19, %c0_20, %c0_21, %c0_22] : memref<1x1x8x128xf32, #tpu.memory_space<vmem>>, vector<1x1x8x128xf32>
      tpu.vector_store %arg5[%c0_19, %c0_20, %c0_21, %c0_22], %23 {strides = array<i32>} : memref<1x1x8x128xf32, #tpu.memory_space<vmem>>, vector<1x1x8x128xf32>,
      %c0_23 = arith.constant 0 : index
      %c0_24 = arith.constant 0 : index
      %25 = vector.load %arg8[%c0_23, %c0_24] : memref<8x128xf32, #tpu.memory_space<vmem>>, vector<8x128xf32>
      %26 = vector.shape_cast %25 : vector<8x128xf32> to vector<1x1x8x128xf32>
      %c0_25 = arith.constant 0 : index
      %c0_26 = arith.constant 0 : index
      %c0_27 = arith.constant 0 : index
      %c0_28 = arith.constant 0 : index
      %27 = vector.load %arg6[%c0_25, %c0_26, %c0_27, %c0_28] : memref<1x1x8x128xf32, #tpu.memory_space<vmem>>, vector<1x1x8x128xf32>
      tpu.vector_store %arg6[%c0_25, %c0_26, %c0_27, %c0_28], %26 {strides = array<i32>} : memref<1x1x8x128xf32, #tpu.memory_space<vmem>>, vector<1x1x8x128xf32>,
    } else {
    }
    return
  }
  func.func @transform_0(%arg0: i32, %arg1: i32, %arg2: i32) -> (i32, i32, i32) {
    %c1_i32 = arith.constant 1 : i32
    %0 = arith.muli %arg1, %c1_i32 : i32
    %1 = arith.addi %0, %arg2 : i32
    %c0_i32 = arith.constant 0 : i32
    %c0_i32_0 = arith.constant 0 : i32
    return %arg0, %1, %c0_i32 : i32, i32, i32
  }
  func.func @transform_1(%arg0: i32, %arg1: i32, %arg2: i32) -> (i32, i32, i32) {
    %c1_i32 = arith.constant 1 : i32
    %0 = arith.muli %arg1, %c1_i32 : i32
    %1 = arith.addi %0, %arg2 : i32
    %c0_i32 = arith.constant 0 : i32
    %c0_i32_0 = arith.constant 0 : i32
    return %arg0, %1, %c0_i32 : i32, i32, i32
  }
  func.func @transform_2(%arg0: i32, %arg1: i32, %arg2: i32) -> (i32, i32, i32, i32) {
    %c0_i32 = arith.constant 0 : i32
    %c0_i32_0 = arith.constant 0 : i32
    %c0_i32_1 = arith.constant 0 : i32
    return %arg0, %arg1, %c0_i32, %c0_i32_0 : i32, i32, i32, i32
  }
  func.func @transform_3(%arg0: i32, %arg1: i32, %arg2: i32) -> (i32, i32, i32, i32) {
    %c0_i32 = arith.constant 0 : i32
    %c0_i32_0 = arith.constant 0 : i32
    %c0_i32_1 = arith.constant 0 : i32
    return %arg0, %arg1, %c0_i32, %c0_i32_0 : i32, i32, i32, i32
  }
}

</mosaic_0001>

<llo_original>
// kernel: tpu_custom_call.1
$region0: #{tpu_custom_call.1}
  #allocation0 [shape = 'u32[]', space=smem, size = 0x4, offset = 0x4, fixed_abs, tag = 'smem constant byte address 0x4 - core index']
  #allocation1 [shape = 'u32[144,128]{1,0:T(1,128)}', space=vmem, size = 0x12000, scoped, tag = 'internal scratch']
  #allocation2 [shape = 'f32[8,128]{1,0:T(8,128)}', space=vmem, size = 0x1000, scoped, tag = 'scratch operand']
  #allocation3 [shape = 'f32[8,128]{1,0:T(8,128)}', space=vmem, size = 0x1000, scoped, tag = 'scratch operand']
  %s0 = inlined_call_operand.hbm [shape: f32[2,16,128], index: 0, kind: input, shape index: {}]
  %s1 = inlined_call_operand.hbm [shape: f32[2,16,128], index: 1, kind: input, shape index: {}]
  %s2 = inlined_call_operand.hbm [shape: f32[2,1,8,128], index: 2, kind: output, shape index: {0}]
  %s3 = inlined_call_operand.hbm [shape: f32[2,1,8,128], index: 3, kind: output, shape index: {1}]
  %4 = xla_tuple %s2, %s3
  %s5 = sld [smem:[#allocation0]]
  $region65: #{tpu_custom_call.1} parent=0
    _
  %s7 = ssub.s32 1, %s5
  %s8 = scalar_select 0, %s7, %s5
  $region1: #{tpu_custom_call.1} parent=0
    #allocation4 [shape = 'u8[16384]{0}', space=vmem, size = 0x4000, scoped, tag = 'input window, operand 0']
    #allocation5 [shape = 's32[2]{0}', space=sflag, size = 0x8, scoped, tag = 'scoped memory for tpu_custom_call.1']
    #allocation6 [shape = 's32[2]{0}', space=sflag, size = 0x8, scoped, tag = 'scoped memory for tpu_custom_call.1']
    #allocation7 [shape = 'u8[16384]{0}', space=vmem, size = 0x4000, scoped, tag = 'input window, operand 1']
    #allocation8 [shape = 's32[2]{0}', space=sflag, size = 0x8, scoped, tag = 'scoped memory for tpu_custom_call.1']
    #allocation9 [shape = 'u8[8192]{0}', space=vmem, size = 0x2000, scoped, tag = 'output window, operand 0']
    #allocation10 [shape = 'u8[8192]{0}', space=vmem, size = 0x2000, scoped, tag = 'output window, operand 1']
    #allocation11 [shape = 's32[2]{0}', space=sflag, size = 0x8, scoped, tag = 'scoped memory for tpu_custom_call.1']
    %9 = vsyncpa [#allocation5], 0
    %s10 = scalar_lea.sflag [#allocation5], 1
    %11 = vsyncpa %s10, 0
    %12 = vsyncpa [#allocation8], 0
    %s13 = scalar_lea.sflag [#allocation8], 1
    %14 = vsyncpa %s13, 0
    %15 = vsyncpa [#allocation6], 0
    %s16 = scalar_lea.sflag [#allocation6], 1
    %17 = vsyncpa %s16, 0
    %18 = vsyncpa [#allocation11], 0
    %s19 = scalar_lea.sflag [#allocation11], 1
    %20 = vsyncpa %s19, 0
    loop: start=0, step=1, limit=4
    $region2: #{tpu_custom_call.1} parent=1 // loop_pre_header
      _
    $region3: #{tpu_custom_call.1} parent=1 // loop_header
      %s22 = sphi 0, %s26
      %p23 = scmp.ge.s32.totalorder %s22, 4
      %s29 = sphi 0, %s48
      %s30 = sphi 0, %s44
      %s31 = sphi 0, %s40
      %s32 = sphi 0, %s29
      %s33 = sphi 0, %s30
      %s34 = sphi 0, %s31
      %s35 = sphi 0, %s32
      %s36 = sphi 0, %s33
      %s37 = sphi 0, %s34
      %s55 = sphi 0, %s57
      %s58 = sphi 0, %s55
      %s59 = sphi 0, %s58
      %s75 = sphi 0, %s59
      %s85 = sphi 0, %s87
      %s88 = sphi 0, %s85
      %s89 = sphi 0, %s88
      %s105 = sphi 0, %s89
      %s113 = sphi 0, %s115
      %s116 = sphi 0, %s113
      %s117 = sphi 0, %s116
      %s133 = sphi 0, %s117
      %s141 = sphi 0, %s143
      %s144 = sphi 0, %s141
      %s145 = sphi 0, %s144
      %s161 = sphi 0, %s145
    $region4: #{tpu_custom_call.1} parent=1 // loop_header_branch
      %25 = sbr.rel (%p23) target = $region8
    $region5: #{tpu_custom_call.1} parent=1 // loop_body
      %s27 = ssub.s32 %s22, 1
      %s28 = ssub.s32 %s22, 2
      %s38 = sadd.s32 1, %s31
      %p39 = scmp.ge.s32.totalorder %s38, 1
      %s40 = scalar_select %p39, 0, %s38
      %s41 = sadd.s32 1, %s30
      %s42 = scalar_select %p39, %s41, %s30
      %p43 = scmp.ge.s32.totalorder %s42, 1
      %s44 = scalar_select %p43, 0, %s42
      %s45 = sadd.s32 1, %s29
      %s46 = scalar_select %p43, %s45, %s29
      %p47 = scmp.ge.s32.totalorder %s46, 2
      %s48 = scalar_select %p47, 0, %s46
      %s49 = sadd.s32 %s30, %s31
      %s50 = sadd.s32 %s44, %s40
      %s51 = ssub.s32 %s29, %s48
      %s52 = ssub.s32 %s49, %s50
      %s53 = sor.u32 %s51, %s52
      %p54 = scmp.eq.s32.totalorder %s53, 0
      %s56 = sadd.s32 %s55, 1
      %s57 = scalar_select %p54, %s55, %s56
      %p60 = pneg %p54
      %p61 = scmp.eq.s32.totalorder %s22, 1
      %p62 = por %p60, %p61
      %p63 = scmp.ne.s32.totalorder %s55, %s58
      %p64 = scmp.eq.s32.totalorder %s22, 0
      %p65 = por %p63, %p64
      %p66 = scmp.ne.s32.totalorder %s55, %s58
      %p67 = scmp.eq.s32.totalorder %s27, 1
      %p68 = por %p66, %p67
      %p69 = scmp.ne.s32.totalorder %s58, %s59
      %p70 = scmp.eq.s32.totalorder %s27, 0
      %p71 = por %p69, %p70
      %p72 = scmp.ne.s32.totalorder %s58, %s59
      %p73 = scmp.eq.s32.totalorder %s28, 1
      %p74 = por %p72, %p73
      %p76 = scmp.ne.s32.totalorder %s59, %s75
      %p77 = scmp.eq.s32.totalorder %s28, 0
      %p78 = por %p76, %p77
      %s79 = sadd.s32 %s30, %s31
      %s80 = sadd.s32 %s44, %s40
      %s81 = ssub.s32 %s29, %s48
      %s82 = ssub.s32 %s79, %s80
      %s83 = sor.u32 %s81, %s82
      %p84 = scmp.eq.s32.totalorder %s83, 0
      %s86 = sadd.s32 %s85, 1
      %s87 = scalar_select %p84, %s85, %s86
      %p90 = pneg %p84
      %p91 = scmp.eq.s32.totalorder %s22, 1
      %p92 = por %p90, %p91
      %p93 = scmp.ne.s32.totalorder %s85, %s88
      %p94 = scmp.eq.s32.totalorder %s22, 0
      %p95 = por %p93, %p94
      %p96 = scmp.ne.s32.totalorder %s85, %s88
      %p97 = scmp.eq.s32.totalorder %s27, 1
      %p98 = por %p96, %p97
      %p99 = scmp.ne.s32.totalorder %s88, %s89
      %p100 = scmp.eq.s32.totalorder %s27, 0
      %p101 = por %p99, %p100
      %p102 = scmp.ne.s32.totalorder %s88, %s89
      %p103 = scmp.eq.s32.totalorder %s28, 1
      %p104 = por %p102, %p103
      %p106 = scmp.ne.s32.totalorder %s89, %s105
      %p107 = scmp.eq.s32.totalorder %s28, 0
      %p108 = por %p106, %p107
      %s109 = ssub.s32 %s29, %s48
      %s110 = ssub.s32 %s30, %s44
      %s111 = sor.u32 %s109, %s110
      %p112 = scmp.eq.s32.totalorder %s111, 0
      %s114 = sadd.s32 %s113, 1
      %s115 = scalar_select %p112, %s113, %s114
      %p118 = pneg %p112
      %p119 = scmp.eq.s32.totalorder %s22, 1
      %p120 = por %p118, %p119
      %p121 = scmp.ne.s32.totalorder %s113, %s116
      %p122 = scmp.eq.s32.totalorder %s22, 0
      %p123 = por %p121, %p122
      %p124 = scmp.ne.s32.totalorder %s113, %s116
      %p125 = scmp.eq.s32.totalorder %s27, 1
      %p126 = por %p124, %p125
      %p127 = scmp.ne.s32.totalorder %s116, %s117
      %p128 = scmp.eq.s32.totalorder %s27, 0
      %p129 = por %p127, %p128
      %p130 = scmp.ne.s32.totalorder %s116, %s117
      %p131 = scmp.eq.s32.totalorder %s28, 1
      %p132 = por %p130, %p131
      %p134 = scmp.ne.s32.totalorder %s117, %s133
      %p135 = scmp.eq.s32.totalorder %s28, 0
      %p136 = por %p134, %p135
      %s137 = ssub.s32 %s29, %s48
      %s138 = ssub.s32 %s30, %s44
      %s139 = sor.u32 %s137, %s138
      %p140 = scmp.eq.s32.totalorder %s139, 0
      %s142 = sadd.s32 %s141, 1
      %s143 = scalar_select %p140, %s141, %s142
      %p146 = pneg %p140
      %p147 = scmp.eq.s32.totalorder %s22, 1
      %p148 = por %p146, %p147
      %p149 = scmp.ne.s32.totalorder %s141, %s144
      %p150 = scmp.eq.s32.totalorder %s22, 0
      %p151 = por %p149, %p150
      %p152 = scmp.ne.s32.totalorder %s141, %s144
      %p153 = scmp.eq.s32.totalorder %s27, 1
      %p154 = por %p152, %p153
      %p155 = scmp.ne.s32.totalorder %s144, %s145
      %p156 = scmp.eq.s32.totalorder %s27, 0
      %p157 = por %p155, %p156
      %p158 = scmp.ne.s32.totalorder %s144, %s145
      %p159 = scmp.eq.s32.totalorder %s28, 1
      %p160 = por %p158, %p159
      %p162 = scmp.ne.s32.totalorder %s145, %s161
      %p163 = scmp.eq.s32.totalorder %s28, 0
      %p164 = por %p162, %p163
      %p165 = scmp.le.s32.totalorder 1, %s22
      %p166 = scmp.lt.s32.totalorder %s22, 3
      %p167 = pnand %p165, %p166
      %p168 = pneg %p167
      // Predicated region
      $region9: #{tpu_custom_call.1} parent=5 // pred_check
        _
      $region10: #{tpu_custom_call.1} parent=5 // pred_check_branch
        %170 = sbr.rel (%p167) target = $region12
      $region11: #{tpu_custom_call.1} parent=5 // pred_region
        %s171 = ssub.s32 %s22, 1
      $region12: #{tpu_custom_call.1} parent=5 // pred_fallthru
        _
      %p172 = scmp.lt.s32.totalorder %s22, 2
      // Predicated region
      $region13: #{tpu_custom_call.1} parent=5 // pred_check
        %p173 = pneg %p172
      $region14: #{tpu_custom_call.1} parent=5 // pred_check_branch
        %175 = sbr.rel (%p173) target = $region16
      $region15: #{tpu_custom_call.1} parent=5 // pred_region
        // Predicated region
        $region17: #{tpu_custom_call.1} parent=15 // pred_check
          %p176 = pneg %p65
        $region18: #{tpu_custom_call.1} parent=15 // pred_check_branch
          %178 = sbr.rel (%p176) target = $region20
        $region19: #{tpu_custom_call.1} parent=15 // pred_region
          %s179 = sand.u32 %s55, 1
          %s180 = scalar_lea.sflag [#allocation5], %s179
          %s181 = sand.u32 %s55, 1
          %s182 = smul.addr %s181, 16
          %s183 = scalar_lea.vmem [#allocation4], %s182
          %s184 = sadd.s32 %s30, %s31
          %s185 = smul.u32 2, %s184
          %s187 = ssub.s32 256, 256
          %188 = vsyncadd %s180, %s187
          %s189 = smul.addr %s29, 2
          %s190 = sadd.s32 %s185, %s189
          %s191 = smul.addr %s190, 128
          %s192 = scalar_lea.hbm %s0, %s191
          %s193 = sshll.u32 %s183, 4
          %s194 = int_to_ptr.vmem [resolvable:$true] %s193
          %199 = dma.hbm_to_vmem [thread:$0]  %s192, 256, %s194, %s180, 128, 128, 8
        $region20: #{tpu_custom_call.1} parent=15 // pred_fallthru
          _
        // Predicated region
        $region21: #{tpu_custom_call.1} parent=15 // pred_check
          %p200 = pneg %p95
        $region22: #{tpu_custom_call.1} parent=15 // pred_check_branch
          %202 = sbr.rel (%p200) target = $region24
        $region23: #{tpu_custom_call.1} parent=15 // pred_region
          %s203 = sand.u32 %s85, 1
          %s204 = scalar_lea.sflag [#allocation8], %s203
          %s205 = sand.u32 %s85, 1
          %s206 = smul.addr %s205, 16
          %s207 = scalar_lea.vmem [#allocation7], %s206
          %s208 = sadd.s32 %s30, %s31
          %s209 = smul.u32 2, %s208
          %s211 = ssub.s32 256, 256
          %212 = vsyncadd %s204, %s211
          %s213 = smul.addr %s29, 2
          %s214 = sadd.s32 %s209, %s213
          %s215 = smul.addr %s214, 128
          %s216 = scalar_lea.hbm %s1, %s215
          %s217 = sshll.u32 %s207, 4
          %s218 = int_to_ptr.vmem [resolvable:$true] %s217
          %223 = dma.hbm_to_vmem [thread:$0]  %s216, 256, %s218, %s204, 128, 128, 8
        $region24: #{tpu_custom_call.1} parent=15 // pred_fallthru
          _
      $region16: #{tpu_custom_call.1} parent=5 // pred_fallthru
        _
      %p224 = scmp.le.s32.totalorder 1, %s22
      %p225 = scmp.lt.s32.totalorder %s22, 3
      %p226 = pnand %p224, %p225
      %p227 = pneg %p226
      // Predicated region
      $region25: #{tpu_custom_call.1} parent=5 // pred_check
        _
      $region26: #{tpu_custom_call.1} parent=5 // pred_check_branch
        %229 = sbr.rel (%p226) target = $region28
      $region27: #{tpu_custom_call.1} parent=5 // pred_region
        %s230 = ssub.s32 %s22, 1
        %s231 = sand.u32 %s58, 1
        %s232 = scalar_lea.sflag [#allocation5], %s231
        %s233 = sand.u32 %s58, 1
        %s234 = smul.addr %s233, 16
        %s235 = scalar_lea.vmem [#allocation4], %s234
        // Predicated region
        $region29: #{tpu_custom_call.1} parent=27 // pred_check
          %p236 = pneg %p71
        $region30: #{tpu_custom_call.1} parent=27 // pred_check_branch
          %238 = sbr.rel (%p236) target = $region32
        $region31: #{tpu_custom_call.1} parent=27 // pred_region
          %239 = dma.done %s232, 256
        $region32: #{tpu_custom_call.1} parent=27 // pred_fallthru
          _
        %s240 = sand.u32 %s88, 1
        %s241 = scalar_lea.sflag [#allocation8], %s240
        %s242 = sand.u32 %s88, 1
        %s243 = smul.addr %s242, 16
        %s244 = scalar_lea.vmem [#allocation7], %s243
        // Predicated region
        $region33: #{tpu_custom_call.1} parent=27 // pred_check
          %p245 = pneg %p101
        $region34: #{tpu_custom_call.1} parent=27 // pred_check_branch
          %247 = sbr.rel (%p245) target = $region36
        $region35: #{tpu_custom_call.1} parent=27 // pred_region
          %248 = dma.done %s241, 256
        $region36: #{tpu_custom_call.1} parent=27 // pred_fallthru
          _
        %s249 = sand.u32 %s58, 1
        %s250 = scalar_lea.sflag [#allocation5], %s249
        %s251 = sand.u32 %s58, 1
        %s252 = smul.addr %s251, 16
        %s253 = scalar_lea.vmem [#allocation4], %s252
        %p254 = pneg %p71
        %p255 = pneg %p68
        %s256 = sand.u32 %s88, 1
        %s257 = scalar_lea.sflag [#allocation8], %s256
        %s258 = sand.u32 %s88, 1
        %s259 = smul.addr %s258, 16
        %s260 = scalar_lea.vmem [#allocation7], %s259
        %p261 = pneg %p101
        %p262 = pneg %p98
        %p263 = pneg %p129
        %p264 = pneg %p126
        %s265 = sand.u32 %s116, 1
        %s266 = scalar_lea.sflag [#allocation6], %s265
        %s267 = sand.u32 %s116, 1
        %s268 = smul.addr %s267, 8
        %s269 = scalar_lea.vmem [#allocation9], %s268
        %p270 = pneg %p157
        %p271 = pneg %p154
        %s272 = sand.u32 %s144, 1
        %s273 = scalar_lea.sflag [#allocation11], %s272
        %s274 = sand.u32 %s144, 1
        %s275 = smul.addr %s274, 8
        %s276 = scalar_lea.vmem [#allocation10], %s275
        %s277 = sadd.s32 %s33, %s34
        %s278 = smul.u32 2, %s277
        %s279 = sadd.s32 %s33, %s34
        %s280 = smul.u32 2, %s279
        %p281 = scmp.eq.s32.totalorder %s34, 0
        // Predicated region
        $region37: #{tpu_custom_call.1} parent=27 // pred_check
          %p282 = pneg %p281
        $region38: #{tpu_custom_call.1} parent=27 // pred_check_branch
          %284 = sbr.rel (%p282) target = $region40
        $region39: #{tpu_custom_call.1} parent=27 // pred_region
          %285 = vst [vmem:[#allocation2] sm:$0xff] 0.0
          %286 = vst [vmem:[#allocation3] sm:$0xff] 0.0
        $region40: #{tpu_custom_call.1} parent=27 // pred_fallthru
          _
        %v287 = vld [vmem:[%s235] sm:$0xff]
        %v288 = vld [vmem:[%s235 + $0x8] sm:$0xff]
        %v289 = vld [vmem:[%s244] sm:$0xff]
        %v290 = vld [vmem:[%s244 + $0x8] sm:$0xff]
        %v291 = vld [vmem:[#allocation2] sm:$0xff]
        %v292 = vmul.f32 %v287, %v289
        %v293 = vmul.f32 %v288, %v290
        %v294 = vadd.f32 %v292, %v293
        %v295 = vadd.f32 %v291, %v294
        %296 = vst [vmem:[#allocation2] sm:$0xff] %v295
        %v297 = vld [vmem:[#allocation3] sm:$0xff]
        %v298 = vadd.f32 %v287, %v289
        %v299 = vadd.f32 %v288, %v290
        %v300 = vadd.f32 %v298, %v299
        %v301 = vadd.f32 %v297, %v300
        %302 = vst [vmem:[#allocation3] sm:$0xff] %v301
        // Predicated region
        $region41: #{tpu_custom_call.1} parent=27 // pred_check
          %p303 = pneg %p281
        $region42: #{tpu_custom_call.1} parent=27 // pred_check_branch
          %305 = sbr.rel (%p303) target = $region44
        $region43: #{tpu_custom_call.1} parent=27 // pred_region
          %v306 = vld [vmem:[#allocation2] sm:$0xff]
          %307 = vst [vmem:[%s269] sm:$0xff] %v306
          %v308 = vld [vmem:[#allocation3] sm:$0xff]
          %309 = vst [vmem:[%s276] sm:$0xff] %v308
        $region44: #{tpu_custom_call.1} parent=27 // pred_fallthru
          _
        %s310 = sand.u32 %s116, 1
        %s311 = scalar_lea.sflag [#allocation6], %s310
        %s312 = sand.u32 %s116, 1
        %s313 = smul.addr %s312, 8
        %s314 = scalar_lea.vmem [#allocation9], %s313
        %s315 = sand.u32 %s144, 1
        %s316 = scalar_lea.sflag [#allocation11], %s315
        %s317 = sand.u32 %s144, 1
        %s318 = smul.addr %s317, 8
        %s319 = scalar_lea.vmem [#allocation10], %s318
        // Predicated region
        $region45: #{tpu_custom_call.1} parent=27 // pred_check
          %p320 = pneg %p126
        $region46: #{tpu_custom_call.1} parent=27 // pred_check_branch
          %322 = sbr.rel (%p320) target = $region48
        $region47: #{tpu_custom_call.1} parent=27 // pred_region
          %s324 = ssub.s32 128, 128
          %325 = vsyncadd %s311, %s324
          %s326 = sadd.s32 %s33, %s32
          %s327 = smul.addr %s326, 128
          %s328 = scalar_lea.hbm %s2, %s327
          %s330 = sshll.u32 %s314, 4
          %s331 = int_to_ptr.vmem [resolvable:$true] %s330
          %333 = dma.vmem_to_hbm [thread:$0]  %s331, 128, %s328, %s311
        $region48: #{tpu_custom_call.1} parent=27 // pred_fallthru
          _
        // Predicated region
        $region49: #{tpu_custom_call.1} parent=27 // pred_check
          %p334 = pneg %p154
        $region50: #{tpu_custom_call.1} parent=27 // pred_check_branch
          %336 = sbr.rel (%p334) target = $region52
        $region51: #{tpu_custom_call.1} parent=27 // pred_region
          %s338 = ssub.s32 128, 128
          %339 = vsyncadd %s316, %s338
          %s340 = sadd.s32 %s33, %s32
          %s341 = smul.addr %s340, 128
          %s342 = scalar_lea.hbm %s3, %s341
          %s344 = sshll.u32 %s319, 4
          %s345 = int_to_ptr.vmem [resolvable:$true] %s344
          %347 = dma.vmem_to_hbm [thread:$0]  %s345, 128, %s342, %s316
        $region52: #{tpu_custom_call.1} parent=27 // pred_fallthru
          _
      $region28: #{tpu_custom_call.1} parent=5 // pred_fallthru
        _
      %p348 = scmp.le.s32.totalorder 2, %s22
      // Predicated region
      $region53: #{tpu_custom_call.1} parent=5 // pred_check
        %p349 = pneg %p348
      $region54: #{tpu_custom_call.1} parent=5 // pred_check_branch
        %351 = sbr.rel (%p349) target = $region56
      $region55: #{tpu_custom_call.1} parent=5 // pred_region
        %s352 = ssub.s32 %s22, 2
        // Predicated region
        $region57: #{tpu_custom_call.1} parent=55 // pred_check
          %p353 = pneg %p132
        $region58: #{tpu_custom_call.1} parent=55 // pred_check_branch
          %355 = sbr.rel (%p353) target = $region60
        $region59: #{tpu_custom_call.1} parent=55 // pred_region
          %s356 = sand.u32 %s117, 1
          %s357 = scalar_lea.sflag [#allocation6], %s356
          %s358 = sand.u32 %s117, 1
          %s359 = smul.addr %s358, 8
          %s360 = scalar_lea.vmem [#allocation9], %s359
          %361 = dma.done %s357, 128
        $region60: #{tpu_custom_call.1} parent=55 // pred_fallthru
          _
        // Predicated region
        $region61: #{tpu_custom_call.1} parent=55 // pred_check
          %p362 = pneg %p160
        $region62: #{tpu_custom_call.1} parent=55 // pred_check_branch
          %364 = sbr.rel (%p362) target = $region64
        $region63: #{tpu_custom_call.1} parent=55 // pred_region
          %s365 = sand.u32 %s145, 1
          %s366 = scalar_lea.sflag [#allocation11], %s365
          %s367 = sand.u32 %s145, 1
          %s368 = smul.addr %s367, 8
          %s369 = scalar_lea.vmem [#allocation10], %s368
          %370 = dma.done %s366, 128
        $region64: #{tpu_custom_call.1} parent=55 // pred_fallthru
          _
      $region56: #{tpu_custom_call.1} parent=5 // pred_fallthru
        _
    $region6: #{tpu_custom_call.1} parent=1 // loop_footer
      %s26 = sadd.s32 1, %s22
    $region7: #{tpu_custom_call.1} parent=1 // loop_footer_branch
      %21 = sbr.rel target = $region3
    $region8: #{tpu_custom_call.1} parent=1 // loop_exit
      _
    %371 = vsyncpa [#allocation5], 1
    %s372 = scalar_lea.sflag [#allocation5], 1
    %373 = vsyncpa %s372, 1
    %374 = vsyncpa [#allocation8], 1
    %s375 = scalar_lea.sflag [#allocation8], 1
    %376 = vsyncpa %s375, 1
    %377 = vsyncpa [#allocation6], 1
    %s378 = scalar_lea.sflag [#allocation6], 1
    %379 = vsyncpa %s378, 1
    %380 = vsyncpa [#allocation11], 1
    %s381 = scalar_lea.sflag [#allocation11], 1
    %382 = vsyncpa %s381, 1

</llo_original>
